<compile_context>
chip_gen: v5e
topology: v5e:2x2
jax: 0.10.0
libtpu: 0.0.40
codegen_flags: <defaults>
</compile_context>

<pallas_src>
import functools

import jax
import jax.numpy as jnp
from jax.experimental import pallas as pl
from jax.experimental.pallas import tpu as pltpu


def _cdiv(a, b):
    return -(-a // b)


def _round_up(a, b):
    return _cdiv(a, b) * b


def _detect_num_tensorcores():
    """Best-effort TensorCores-per-device (2 on v7x / megacore-class chips)."""
    try:
        dev = jax.devices()[0]
        if getattr(dev, "platform", "") != "tpu":
            return 1
        n = getattr(dev, "num_cores", None)
        if isinstance(n, int) and 1 <= n <= 8:
            return n
        kind = str(getattr(dev, "device_kind", "")).lower()
        if "v4" in kind or "v5p" in kind or "7" in kind:
            return 2
    except Exception:
        pass
    return 1


def _vmem_capacity_bytes():
    try:
        return int(pltpu.get_tpu_info().vmem_capacity_bytes)
    except Exception:
        return 64 * 1024 * 1024  # conservative (v7x-sized) fallback


def _focal_loss_kernel(x_ref, t_ref, e_ref, b_ref, s_ref, cls_ref, *rest,
                       gamma, alpha_scalar, per_class_alpha, n_valid, k, tn,
                       steps_per_chunk, logits, ids_high_precision):
    """One grid step over a (tn, W) packed-logits tile.

    Packed layout: each row holds k samples x C classes along the lane axis.
    """
    if per_class_alpha:
        sa_ref, o_ref, acc_ref = rest
    else:
        o_ref, acc_ref = rest

    s_idx = pl.program_id(1)

    @pl.when(s_idx == 0)
    def _init():
        acc_ref[...] = jnp.zeros(acc_ref.shape, jnp.float32)

    bf16 = jnp.bfloat16
    f32 = jnp.float32

    x = x_ref[...].astype(f32)        # (tn, W)   packed logits / probs
    t = t_ref[...]                    # (tn, k)   per-slot class id (bf16)
    em = e_ref[...]                   # (k,  W)   slot -> lanes expansion (0/1)
    bm = b_ref[...]                   # (W,  W)   block-diag gather+broadcast (0/1)
    sm = s_ref[...]                   # (W,  k)   lanes -> slot reduction (0/1)
    cls = cls_ref[...]                # (1,  W)   class id of each lane (f32)

    # One-hot of the target class in packed lane space.  t @ E broadcasts each
    # slot's integer-valued target id to its C lanes; a single bf16 MXU pass is
    # exact because every output is one product id*1 (and ids < 256).
    if ids_high_precision:
        t_lane = jnp.dot(t, em, precision=jax.lax.Precision.HIGHEST,
                         preferred_element_type=f32)
    else:
        t_lane = jnp.dot(t, em, preferred_element_type=f32)          # (tn, W)
    onehot = (jnp.abs(t_lane - cls) < 0.5).astype(f32)               # (tn, W)

    if logits:
        # pt = softmax(x)[target].  Shift by the bf16-rounded target logit
        # x_true_b (one fused block-diagonal matmul).  The rounding residual
        # d = x_true - x_true_b is re-gathered and applied to the numerator so
        # the inexact shift cancels exactly:
        #     pt = exp(d) / sum_c exp(x_c - x_true_b)
        # No per-sample max is needed: overflow of a non-target exp only
        # happens when pt << 1e-8, where the reference is eps-clamped anyway.
        xm = x * onehot
        x_true_lane = jnp.dot(xm.astype(bf16), bm,
                              preferred_element_type=f32)            # (tn, W)
        diff = x - x_true_lane
        z = jnp.exp(diff)                                            # (tn, W)
        denom = jnp.dot(z.astype(bf16), sm,
                        preferred_element_type=f32)                  # (tn, k)
        d = jnp.dot((diff * onehot).astype(bf16), sm,
                    preferred_element_type=f32)                      # (tn, k)
        pt = jnp.exp(d) * pl.reciprocal(denom, approx=True)          # (tn, k)
    else:
        # Inputs are probabilities: gather them with a hi/lo split so pt keeps
        # ~f32 accuracy through the single-pass bf16 matmuls.
        xm = x * onehot
        xm_hi = xm.astype(bf16)
        pt = (jnp.dot(xm_hi, sm, preferred_element_type=f32) +
              jnp.dot((xm - xm_hi.astype(f32)).astype(bf16), sm,
                      preferred_element_type=f32))                   # (tn, k)

    one_m = jnp.maximum(1.0 - pt, 0.0)
    g = float(gamma)
    if g == 2.0:                       # default: plain square, no pow
        fw = one_m * one_m
    elif g == round(g) and g >= 0.0:
        fw = one_m ** int(g)           # integer_pow -> repeated multiplies
    else:
        fw = one_m ** jnp.float32(g)
    loss = fw * (-jnp.log(pt + 1e-8))                                # (tn, k)

    if per_class_alpha:
        # alpha[target] via one tiny 0/1 matmul; SA holds the per-class
        # weights in bf16 (<= 2^-9 relative rounding of a loss weighting).
        alpha_t = jnp.dot(onehot.astype(bf16), sa_ref[...],
                          preferred_element_type=f32)                # (tn, k)
        loss = loss * alpha_t
    elif float(alpha_scalar) != 1.0:
        loss = loss * jnp.float32(alpha_scalar)

    # Validity masking only on tiles that can contain padded / out-of-range
    # samples; everything else takes the unmasked fast path.
    tile_idx = pl.program_id(0) * steps_per_chunk + s_idx
    first_sample = tile_idx * (tn * k)   # NOTE: int32 -> assumes N < 2**31
    needs_mask = first_sample + tn * k > n_valid

    @pl.when(needs_mask)
    def _accum_masked():
        row = jax.lax.broadcasted_iota(jnp.int32, loss.shape, 0)
        slot = jax.lax.broadcasted_iota(jnp.int32, loss.shape, 1)
        sample = first_sample + row * k + slot
        safe = jnp.where(sample < n_valid, loss, 0.0)   # also kills edge-block NaNs
        acc_ref[...] += jnp.sum(safe, axis=0, keepdims=True)

    @pl.when(jnp.logical_not(needs_mask))
    def _accum():
        acc_ref[...] += jnp.sum(loss, axis=0, keepdims=True)

    @pl.when(s_idx == pl.num_programs(1) - 1)
    def _finalize():
        o_ref[...] = acc_ref[...][None]


def focal_loss(inputs, targets, alpha=1.0, gamma=2.0, logits=True,
               reduction="mean", *, _tile_rows=None, _num_chunks=None):
    """Multi-class focal loss matching nnunetv2 FocalLossClass.forward.

    inputs : (N, C) float32 / bfloat16 logits (probabilities if logits=False)
    targets: (N,) or (N, 1) integer class indices in [0, C)
    alpha  : python scalar or length-C per-class weights
    """
    if reduction not in ("mean", "sum"):
        # TODO(synk): reduction='none' (per-sample, unreduced output) needs an
        # (N,)-shaped output spec; only 'mean'/'sum' are implemented.
        raise NotImplementedError("reduction must be 'mean' or 'sum'")

    N, C = inputs.shape
    if targets.ndim == 2 and targets.shape[1] == 1:
        targets = targets.reshape(N)

    alpha_vec = jnp.asarray(alpha, dtype=jnp.float32).reshape(-1)
    per_class = int(alpha_vec.size) > 1
    if per_class and alpha_vec.size != C:
        raise ValueError(f"alpha length {alpha_vec.size} != num classes {C}")
    alpha_scalar = 1.0 if per_class else float(alpha_vec[0])

    # --- lane-dense packing constants ----------------------------------------
    k = max(1, 128 // C)
    W = k * C
    ids_high_precision = C > 256            # bf16 ids exact only for C <= 256
    t_dtype = jnp.float32 if ids_high_precision else jnp.bfloat16
    e_dtype = jnp.float32 if ids_high_precision else jnp.bfloat16

    lane = jnp.arange(W, dtype=jnp.int32)
    slot_of_lane = lane // C
    cls_lane = (lane % C).astype(jnp.float32).reshape(1, W)                # (1, W)
    E = (slot_of_lane[None, :] ==
         jnp.arange(k, dtype=jnp.int32)[:, None]).astype(e_dtype)          # (k, W)
    S = (slot_of_lane[:, None] ==
         jnp.arange(k, dtype=jnp.int32)[None, :]).astype(jnp.bfloat16)     # (W, k)
    B = (slot_of_lane[:, None] ==
         slot_of_lane[None, :]).astype(jnp.bfloat16)                       # (W, W)
    if per_class:
        alpha_lane = jnp.tile(alpha_vec, (k,))                             # (W,)
        SA = jnp.where(slot_of_lane[:, None] ==
                       jnp.arange(k, dtype=jnp.int32)[None, :],
                       alpha_lane[:, None], 0.0).astype(jnp.bfloat16)      # (W, k)

    # --- host-side packing (copy-free when N is a multiple of k) -------------
    t_i32 = targets.astype(jnp.int32)
    rem = N % k
    if rem:
        # NOTE: only triggers when N is not a multiple of the packing factor k
        # (pads <= k-1 samples, but does materialise a copy of `inputs`).
        pad = k - rem
        x_flat = jnp.pad(inputs, ((0, pad), (0, 0)))
        t_flat = jnp.pad(t_i32, (0, pad))
    else:
        x_flat, t_flat = inputs, t_i32
    R = x_flat.shape[0] // k
    x_packed = x_flat.reshape(R, W)                     # contiguous reshape
    t_packed = t_flat.astype(t_dtype).reshape(R, k)

    # --- per-generation tile sizing / grid ------------------------------------
    itemsize = jnp.dtype(inputs.dtype).itemsize
    t_isize = jnp.dtype(t_dtype).itemsize
    vmem_cap = _vmem_capacity_bytes()
    target_bytes = 16 * 1024 * 1024 if vmem_cap >= 96 * 1024 * 1024 else 8 * 1024 * 1024
    if _tile_rows is not None:
        tn = max(8, (int(_tile_rows) // 8) * 8)
    else:
        tn = max(8, (target_bytes // (W * itemsize) // 8) * 8)
    tn = min(tn, _round_up(R, 8))

    detected_cores = _detect_num_tensorcores()
    num_chunks = detected_cores if _num_chunks is None else int(_num_chunks)
    num_chunks = max(1, min(2, num_chunks))
    steps = _cdiv(R, num_chunks * tn)
    if num_chunks > 1 and (num_chunks - 1) * steps * tn >= R:
        num_chunks = 1                                  # avoid an all-padding chunk
        steps = _cdiv(R, tn)
    use_core_parallel = num_chunks > 1 and detected_cores >= num_chunks

    needed = 2 * tn * W * itemsize + 2 * tn * k * t_isize + 2 * 1024 * 1024
    vmem_limit = int(min(vmem_cap,
                         max(32 * 1024 * 1024, needed + 8 * 1024 * 1024)))

    kernel = functools.partial(
        _focal_loss_kernel, gamma=float(gamma), alpha_scalar=alpha_scalar,
        per_class_alpha=per_class, n_valid=int(N), k=int(k), tn=int(tn),
        steps_per_chunk=int(steps), logits=bool(logits),
        ids_high_precision=ids_high_precision)

    last_block = _cdiv(R, tn) - 1
    row_map = lambda p, s: (jnp.minimum(p * steps + s, last_block), 0)
    const_map = lambda p, s: (0, 0)

    in_specs = [
        pl.BlockSpec((tn, W), row_map),                 # packed logits tile
        pl.BlockSpec((tn, k), row_map),                 # packed targets tile
        pl.BlockSpec((k, W), const_map),                # E (resident)
        pl.BlockSpec((W, W), const_map),                # B = block-diag (resident)
        pl.BlockSpec((W, k), const_map),                # S (resident)
        pl.BlockSpec((1, W), const_map),                # lane class ids (resident)
    ]
    operands = [x_packed, t_packed, E, B, S, cls_lane]
    if per_class:
        in_specs.append(pl.BlockSpec((W, k), const_map))  # S * alpha (resident)
        operands.append(SA)

    def _call(dim_sem):
        return pl.pallas_call(
            kernel,
            out_shape=jax.ShapeDtypeStruct((num_chunks, 1, k), jnp.float32),
            grid_spec=pltpu.PrefetchScalarGridSpec(
                num_scalar_prefetch=0,
                grid=(num_chunks, steps),
                in_specs=in_specs,
                out_specs=pl.BlockSpec((1, 1, k), lambda p, s: (p, 0, 0)),
                scratch_shapes=[pltpu.VMEM((1, k), jnp.float32)],
            ),
            compiler_params=pltpu.CompilerParams(
                dimension_semantics=dim_sem,
                vmem_limit_bytes=vmem_limit,
            ),
        )(*operands)

    if use_core_parallel:
        try:  # split the chunk axis across the two TensorCores (v7x-class)
            out = _call((pltpu.CORE_PARALLEL, pltpu.ARBITRARY))
        except Exception:
            out = _call((pltpu.ARBITRARY, pltpu.ARBITRARY))
    else:
        out = _call((pltpu.ARBITRARY, pltpu.ARBITRARY))

    total = jnp.sum(out)                                # per-chunk partial sums
    if reduction == "mean":
        return total / jnp.float32(N)
    return total


def _reference_focal_loss(inputs, targets, alpha=1.0, gamma=2.0, logits=True,
                          reduction="mean"):
    """Pure-JAX mirror of the PyTorch FocalLossClass.forward."""
    N, C = inputs.shape
    targets = targets.reshape(-1).astype(jnp.int32)
    alpha_vec = jnp.asarray(alpha, dtype=jnp.float32).reshape(-1)
    if alpha_vec.size == 1:
        alpha_g = jnp.broadcast_to(alpha_vec[0], (N,))
    else:
        alpha_g = alpha_vec[targets]
    x = inputs.astype(jnp.float32)
    probs = jax.nn.softmax(x, axis=1) if logits else x
    pt = jnp.take_along_axis(probs, targets.reshape(N, 1), axis=1)[:, 0]
    fw = alpha_g * (1.0 - pt) ** gamma
    loss = -fw * jnp.log(pt + 1e-8)
    if reduction == "mean":
        return jnp.mean(loss)
    if reduction == "sum":
        return jnp.sum(loss)
    return loss


if __name__ == "__main__":
    key = jax.random.PRNGKey(0)
    k1, k2, k3, k4 = jax.random.split(key, 4)

    # Test A: module defaults (alpha=1, gamma=2, logits=True, 'mean'), tiny
    # shape, N not aligned to the packing (exercises the masked edge block).
    N1, C1 = 8, 4
    x1 = jax.random.normal(k1, (N1, C1), dtype=jnp.float32)
    t1 = jax.random.randint(k2, (N1,), 0, C1, dtype=jnp.int32)
    out1 = jax.block_until_ready(focal_loss(x1, t1))
    ref1 = _reference_focal_loss(x1, t1)
    assert jnp.allclose(out1, ref1, rtol=3e-3, atol=1e-5), (out1, ref1)

    # Test B: per-class alpha, forced small tile and a forced 2-chunk grid so
    # the multi-step + multi-chunk accumulation paths are exercised (kept on
    # safe 'arbitrary' semantics when only one TensorCore is present).
    N2, C2 = 1000, 5
    x2 = 3.0 * jax.random.normal(k3, (N2, C2), dtype=jnp.float32)
    t2 = jax.random.randint(k4, (N2,), 0, C2, dtype=jnp.int32)
    a2 = [0.25, 0.5, 1.0, 1.5, 2.0]
    out2 = jax.block_until_ready(focal_loss(x2, t2, alpha=a2, gamma=2.0,
                                            _tile_rows=8, _num_chunks=2))
    ref2 = _reference_focal_loss(x2, t2, alpha=a2, gamma=2.0)
    assert jnp.allclose(out2, ref2, rtol=3e-3, atol=1e-5), (out2, ref2)

    # Test C: 'sum' reduction, default scalar-alpha fast path with auto tiling.
    out3 = jax.block_until_ready(focal_loss(x2, t2, reduction="sum"))
    ref3 = _reference_focal_loss(x2, t2, reduction="sum")
    assert jnp.allclose(out3, ref3, rtol=3e-3, atol=1e-3), (out3, ref3)

    print("KERNEL_OK")
</pallas_src>

<mosaic_0001>
module attributes {stable_mosaic.version = 11 : i64} {
  func.func @_focal_loss_kernel(%arg0: i32, %arg1: i32, %arg2: memref<8x128xf32, #tpu.memory_space<vmem>>, %arg3: memref<8x32xbf16, #tpu.memory_space<vmem>>, %arg4: memref<32x128xbf16, #tpu.memory_space<vmem>>, %arg5: memref<128x128xbf16, #tpu.memory_space<vmem>>, %arg6: memref<128x32xbf16, #tpu.memory_space<vmem>>, %arg7: memref<1x128xf32, #tpu.memory_space<vmem>>, %arg8: memref<1x1x32xf32, #tpu.memory_space<vmem>>, %arg9: memref<1x32xf32, #tpu.memory_space<vmem>>) attributes {dimension_semantics = [#tpu.dimension_semantics<arbitrary>, #tpu.dimension_semantics<arbitrary>], iteration_bounds = array<i64: 1, 1>, scalar_prefetch = 0 : i64, scratch_operands = 1 : i64, tpu.core_type = #tpu.core_type<tc>, window_params = [{transform_indices = @transform_0, window_bounds = array<i64: 8, 128>}, {transform_indices = @transform_1, window_bounds = array<i64: 8, 32>}, {pipeline_mode = #tpu.pipeline_mode<synchronous>, transform_indices = @transform_2, window_bounds = array<i64: 32, 128>}, {pipeline_mode = #tpu.pipeline_mode<synchronous>, transform_indices = @transform_3, window_bounds = array<i64: 128, 128>}, {pipeline_mode = #tpu.pipeline_mode<synchronous>, transform_indices = @transform_4, window_bounds = array<i64: 128, 32>}, {pipeline_mode = #tpu.pipeline_mode<synchronous>, transform_indices = @transform_5, window_bounds = array<i64: 1, 128>}, {transform_indices = @transform_6, window_bounds = array<i64: 1, 1, 32>}]} {
    %c0_i32 = arith.constant 0 : i32
    %0 = arith.cmpi eq, %arg1, %c0_i32 : i32
    %1 = arith.extui %0 : i1 to i32
    %c0_i32_0 = arith.constant 0 : i32
    %2 = arith.cmpi ne, %1, %c0_i32_0 : i32
    scf.if %2 {
      %cst_25 = arith.constant 0.000000e+00 : f32
      %54 = vector.broadcast %cst_25 : f32 to vector<1x32xf32>
      %c0_26 = arith.constant 0 : index
      %c0_27 = arith.constant 0 : index
      %55 = vector.load %arg9[%c0_26, %c0_27] : memref<1x32xf32, #tpu.memory_space<vmem>>, vector<1x32xf32>
      tpu.vector_store %arg9[%c0_26, %c0_27], %54 {strides = array<i32>} : memref<1x32xf32, #tpu.memory_space<vmem>>, vector<1x32xf32>,
    } else {
    }
    %c0 = arith.constant 0 : index
    %c0_1 = arith.constant 0 : index
    %3 = vector.load %arg2[%c0, %c0_1] : memref<8x128xf32, #tpu.memory_space<vmem>>, vector<8x128xf32>
    %c0_2 = arith.constant 0 : index
    %c0_3 = arith.constant 0 : index
    %4 = vector.load %arg3[%c0_2, %c0_3] : memref<8x32xbf16, #tpu.memory_space<vmem>>, vector<8x32xbf16>
    %c0_4 = arith.constant 0 : index
    %c0_5 = arith.constant 0 : index
    %5 = vector.load %arg4[%c0_4, %c0_5] : memref<32x128xbf16, #tpu.memory_space<vmem>>, vector<32x128xbf16>
    %c0_6 = arith.constant 0 : index
    %c0_7 = arith.constant 0 : index
    %6 = vector.load %arg5[%c0_6, %c0_7] : memref<128x128xbf16, #tpu.memory_space<vmem>>, vector<128x128xbf16>
    %c0_8 = arith.constant 0 : index
    %c0_9 = arith.constant 0 : index
    %7 = vector.load %arg6[%c0_8, %c0_9] : memref<128x32xbf16, #tpu.memory_space<vmem>>, vector<128x32xbf16>
    %c0_10 = arith.constant 0 : index
    %c0_11 = arith.constant 0 : index
    %8 = vector.load %arg7[%c0_10, %c0_11] : memref<1x128xf32, #tpu.memory_space<vmem>>, vector<1x128xf32>
    %cst = arith.constant dense<0.000000e+00> : vector<8x128xf32>
    %9 = tpu.matmul %4, %5, %cst {dimension_numbers = #tpu.dot_dimension_numbers<[1], [0], [0], [1], [0, 0, 1, 1], [], []>} : vector<8x32xbf16>, vector<32x128xbf16>, vector<8x128xf32> -> vector<8x128xf32>
    %10 = vector.broadcast %8 : vector<1x128xf32> to vector<8x128xf32>
    %11 = arith.subf %9, %10 : vector<8x128xf32>
    %12 = math.absf %11 : vector<8x128xf32>
    %cst_12 = arith.constant 5.000000e-01 : f32
    %13 = vector.broadcast %cst_12 : f32 to vector<8x128xf32>
    %14 = arith.cmpf olt, %12, %13 : vector<8x128xf32>
    %15 = arith.extui %14 : vector<8x128xi1> to vector<8x128xi32>
    %16 = arith.sitofp %15 : vector<8x128xi32> to vector<8x128xf32>
    %17 = arith.mulf %3, %16 : vector<8x128xf32>
    %18 = arith.truncf %17 : vector<8x128xf32> to vector<8x128xbf16>
    %cst_13 = arith.constant dense<0.000000e+00> : vector<8x128xf32>
    %19 = tpu.matmul %18, %6, %cst_13 {dimension_numbers = #tpu.dot_dimension_numbers<[1], [0], [0], [1], [0, 0, 1, 1], [], []>} : vector<8x128xbf16>, vector<128x128xbf16>, vector<8x128xf32> -> vector<8x128xf32>
    %20 = arith.subf %3, %19 : vector<8x128xf32>
    %21 = math.exp %20 : vector<8x128xf32>
    %22 = arith.truncf %21 : vector<8x128xf32> to vector<8x128xbf16>
    %cst_14 = arith.constant dense<0.000000e+00> : vector<8x32xf32>
    %23 = tpu.matmul %22, %7, %cst_14 {dimension_numbers = #tpu.dot_dimension_numbers<[1], [0], [0], [1], [0, 0, 1, 1], [], []>} : vector<8x128xbf16>, vector<128x32xbf16>, vector<8x32xf32> -> vector<8x32xf32>
    %24 = arith.mulf %20, %16 : vector<8x128xf32>
    %25 = arith.truncf %24 : vector<8x128xf32> to vector<8x128xbf16>
    %cst_15 = arith.constant dense<0.000000e+00> : vector<8x32xf32>
    %26 = tpu.matmul %25, %7, %cst_15 {dimension_numbers = #tpu.dot_dimension_numbers<[1], [0], [0], [1], [0, 0, 1, 1], [], []>} : vector<8x128xbf16>, vector<128x32xbf16>, vector<8x32xf32> -> vector<8x32xf32>
    %27 = math.exp %26 : vector<8x32xf32>
    %28 = tpu.reciprocal %23 {approx = true} : vector<8x32xf32> -> vector<8x32xf32>
    %29 = arith.mulf %27, %28 : vector<8x32xf32>
    %cst_16 = arith.constant 1.000000e+00 : f32
    %30 = vector.broadcast %cst_16 : f32 to vector<8x32xf32>
    %31 = arith.subf %30, %29 : vector<8x32xf32>
    %cst_17 = arith.constant 0.000000e+00 : f32
    %32 = vector.broadcast %cst_17 : f32 to vector<8x32xf32>
    %33 = arith.maximumf %31, %32 : vector<8x32xf32>
    %34 = arith.mulf %33, %33 : vector<8x32xf32>
    %cst_18 = arith.constant 9.99999993E-9 : f32
    %35 = vector.broadcast %cst_18 : f32 to vector<8x32xf32>
    %36 = arith.addf %29, %35 : vector<8x32xf32>
    %37 = math.log %36 : vector<8x32xf32>
    %cst_19 = arith.constant 0.000000e+00 : f32
    %38 = vector.broadcast %cst_19 : f32 to vector<8x32xf32>
    %39 = arith.subf %38, %37 : vector<8x32xf32>
    %40 = arith.mulf %34, %39 : vector<8x32xf32>
    %c1_i32 = arith.constant 1 : i32
    %41 = arith.muli %arg0, %c1_i32 : i32
    %42 = arith.addi %41, %arg1 : i32
    %c256_i32 = arith.constant 256 : i32
    %43 = arith.muli %42, %c256_i32 : i32
    %c256_i32_20 = arith.constant 256 : i32
    %44 = arith.addi %43, %c256_i32_20 : i32
    %c8_i32 = arith.constant 8 : i32
    %45 = arith.cmpi sgt, %44, %c8_i32 : i32
    %46 = arith.extui %45 : i1 to i32
    %c0_i32_21 = arith.constant 0 : i32
    %47 = arith.cmpi ne, %46, %c0_i32_21 : i32
    scf.if %47 {
      %54 = tpu.iota {dimensions = array<i32: 0>} : vector<8x32xi32>
      %55 = tpu.iota {dimensions = array<i32: 1>} : vector<8x32xi32>
      %c32_i32 = arith.constant 32 : i32
      %56 = vector.broadcast %c32_i32 : i32 to vector<8x32xi32>
      %57 = arith.muli %54, %56 : vector<8x32xi32>
      %58 = vector.broadcast %43 : i32 to vector<8x32xi32>
      %59 = arith.addi %58, %57 : vector<8x32xi32>
      %60 = arith.addi %59, %55 : vector<8x32xi32>
      %c8_i32_25 = arith.constant 8 : i32
      %61 = vector.broadcast %c8_i32_25 : i32 to vector<8x32xi32>
      %62 = arith.cmpi slt, %60, %61 : vector<8x32xi32>
      %cst_26 = arith.constant 0.000000e+00 : f32
      %63 = vector.broadcast %cst_26 : f32 to vector<8x32xf32>
      %64 = arith.select %62, %40, %63 : vector<8x32xi1>, vector<8x32xf32>
      %c0_27 = arith.constant 0 : index
      %c0_28 = arith.constant 0 : index
      %65 = vector.load %arg9[%c0_27, %c0_28] : memref<1x32xf32, #tpu.memory_space<vmem>>, vector<1x32xf32>
      %cst_29 = arith.constant dense<0.000000e+00> : vector<32xf32>
      %66 = vector.multi_reduction <add>, %64, %cst_29 [0] : vector<8x32xf32> to vector<32xf32>
      %67 = vector.shape_cast %66 : vector<32xf32> to vector<1x32xf32>
      %68 = arith.addf %65, %67 : vector<1x32xf32>
      %c0_30 = arith.constant 0 : index
      %c0_31 = arith.constant 0 : index
      %69 = vector.load %arg9[%c0_30, %c0_31] : memref<1x32xf32, #tpu.memory_space<vmem>>, vector<1x32xf32>
      tpu.vector_store %arg9[%c0_30, %c0_31], %68 {strides = array<i32>} : memref<1x32xf32, #tpu.memory_space<vmem>>, vector<1x32xf32>,
    } else {
    }
    %true = arith.constant true
    %48 = arith.xori %45, %true : i1
    %49 = arith.extui %48 : i1 to i32
    %c0_i32_22 = arith.constant 0 : i32
    %50 = arith.cmpi ne, %49, %c0_i32_22 : i32
    scf.if %50 {
      %c0_25 = arith.constant 0 : index
      %c0_26 = arith.constant 0 : index
      %54 = vector.load %arg9[%c0_25, %c0_26] : memref<1x32xf32, #tpu.memory_space<vmem>>, vector<1x32xf32>
      %cst_27 = arith.constant dense<0.000000e+00> : vector<32xf32>
      %55 = vector.multi_reduction <add>, %40, %cst_27 [0] : vector<8x32xf32> to vector<32xf32>
      %56 = vector.shape_cast %55 : vector<32xf32> to vector<1x32xf32>
      %57 = arith.addf %54, %56 : vector<1x32xf32>
      %c0_28 = arith.constant 0 : index
      %c0_29 = arith.constant 0 : index
      %58 = vector.load %arg9[%c0_28, %c0_29] : memref<1x32xf32, #tpu.memory_space<vmem>>, vector<1x32xf32>
      tpu.vector_store %arg9[%c0_28, %c0_29], %57 {strides = array<i32>} : memref<1x32xf32, #tpu.memory_space<vmem>>, vector<1x32xf32>,
    } else {
    }
    %c0_i32_23 = arith.constant 0 : i32
    %51 = arith.cmpi eq, %arg1, %c0_i32_23 : i32
    %52 = arith.extui %51 : i1 to i32
    %c0_i32_24 = arith.constant 0 : i32
    %53 = arith.cmpi ne, %52, %c0_i32_24 : i32
    scf.if %53 {
      %c0_25 = arith.constant 0 : index
      %c0_26 = arith.constant 0 : index
      %54 = vector.load %arg9[%c0_25, %c0_26] : memref<1x32xf32, #tpu.memory_space<vmem>>, vector<1x32xf32>
      %55 = vector.shape_cast %54 : vector<1x32xf32> to vector<1x1x32xf32>
      %c0_27 = arith.constant 0 : index
      %c0_28 = arith.constant 0 : index
      %c0_29 = arith.constant 0 : index
      %56 = vector.load %arg8[%c0_27, %c0_28, %c0_29] : memref<1x1x32xf32, #tpu.memory_space<vmem>>, vector<1x1x32xf32>
      tpu.vector_store %arg8[%c0_27, %c0_28, %c0_29], %55 {strides = array<i32>} : memref<1x1x32xf32, #tpu.memory_space<vmem>>, vector<1x1x32xf32>,
    } else {
    }
    return
  }
  func.func @transform_0(%arg0: i32, %arg1: i32) -> (i32, i32) {
    %c1_i32 = arith.constant 1 : i32
    %0 = arith.muli %arg0, %c1_i32 : i32
    %1 = arith.addi %0, %arg1 : i32
    %c0_i32 = arith.constant 0 : i32
    %2 = arith.minsi %1, %c0_i32 : i32
    %c0_i32_0 = arith.constant 0 : i32
    %c0_i32_1 = arith.constant 0 : i32
    return %2, %c0_i32_0 : i32, i32
  }
  func.func @transform_1(%arg0: i32, %arg1: i32) -> (i32, i32) {
    %c1_i32 = arith.constant 1 : i32
    %0 = arith.muli %arg0, %c1_i32 : i32
    %1 = arith.addi %0, %arg1 : i32
    %c0_i32 = arith.constant 0 : i32
    %2 = arith.minsi %1, %c0_i32 : i32
    %c0_i32_0 = arith.constant 0 : i32
    %c0_i32_1 = arith.constant 0 : i32
    return %2, %c0_i32_0 : i32, i32
  }
  func.func @transform_2(%arg0: i32, %arg1: i32) -> (i32, i32) {
    %c0_i32 = arith.constant 0 : i32
    %c0_i32_0 = arith.constant 0 : i32
    %c0_i32_1 = arith.constant 0 : i32
    return %c0_i32, %c0_i32_0 : i32, i32
  }
  func.func @transform_3(%arg0: i32, %arg1: i32) -> (i32, i32) {
    %c0_i32 = arith.constant 0 : i32
    %c0_i32_0 = arith.constant 0 : i32
    %c0_i32_1 = arith.constant 0 : i32
    return %c0_i32, %c0_i32_0 : i32, i32
  }
  func.func @transform_4(%arg0: i32, %arg1: i32) -> (i32, i32) {
    %c0_i32 = arith.constant 0 : i32
    %c0_i32_0 = arith.constant 0 : i32
    %c0_i32_1 = arith.constant 0 : i32
    return %c0_i32, %c0_i32_0 : i32, i32
  }
  func.func @transform_5(%arg0: i32, %arg1: i32) -> (i32, i32) {
    %c0_i32 = arith.constant 0 : i32
    %c0_i32_0 = arith.constant 0 : i32
    %c0_i32_1 = arith.constant 0 : i32
    return %c0_i32, %c0_i32_0 : i32, i32
  }
  func.func @transform_6(%arg0: i32, %arg1: i32) -> (i32, i32, i32) {
    %c0_i32 = arith.constant 0 : i32
    %c0_i32_0 = arith.constant 0 : i32
    %c0_i32_1 = arith.constant 0 : i32
    return %arg0, %c0_i32, %c0_i32_0 : i32, i32, i32
  }
}

</mosaic_0001>

<llo_original>
// kernel: tpu_custom_call.1
$region0: #{tpu_custom_call.1}
  #allocation0 [shape = 'u32[]', space=smem, size = 0x4, offset = 0x4, fixed_abs, tag = 'smem constant byte address 0x4 - core index']
  #allocation1 [shape = 'u32[72,128]{1,0:T(1,128)}', space=vmem, size = 0x9000, scoped, tag = 'internal scratch']
  #allocation2 [shape = 'f32[1,32]{1,0:T(1,128)}', space=vmem, size = 0x200, scoped, tag = 'scratch operand']
  %s0 = inlined_call_operand.vmem [shape: f32[1,128], index: 0, kind: input, shape index: {}]
  %s1 = inlined_call_operand.vmem [shape: bf16[1,32], index: 1, kind: input, shape index: {}]
  %s2 = inlined_call_operand.vmem [shape: bf16[32,128], index: 2, kind: input, shape index: {}]
  %s3 = inlined_call_operand.vmem [shape: bf16[128,128], index: 3, kind: input, shape index: {}]
  %s4 = inlined_call_operand.vmem [shape: bf16[128,32], index: 4, kind: input, shape index: {}]
  %s5 = inlined_call_operand.vmem [shape: f32[1,128], index: 5, kind: input, shape index: {}]
  %s6 = inlined_call_operand.hbm [shape: f32[1,1,32], index: 6, kind: output, shape index: {}]
  %s7 = sld [smem:[#allocation0]]
  $region50: #{tpu_custom_call.1} parent=0
    _
  %s9 = ssub.s32 1, %s7
  %s10 = scalar_select 0, %s9, %s7
  $region1: #{tpu_custom_call.1} parent=0
    #allocation3 [shape = 'u8[512]{0}', space=vmem, size = 0x400, scoped, tag = 'output window, operand 0, single buffered']
    #allocation4 [shape = 's32[1]{0}', space=sflag, size = 0x4, scoped, tag = 'scoped memory for tpu_custom_call.1']
    %11 = vsyncpa [#allocation4], 0
    // Predicated region
    $region2: #{tpu_custom_call.1} parent=1 // pred_check
      _
    $region3: #{tpu_custom_call.1} parent=1 // pred_check_branch
      %13 = sbr.rel (0) target = $region5
    $region4: #{tpu_custom_call.1} parent=1 // pred_region
      %s14 = sadd.s32 0, 0
      %p15 = scmp.lt.s32.totalorder %s14, 0
      %s16 = scalar_select %p15, %s14, 0
      %s17 = smul.u32 8, %s16
      %s18 = ssub.s32 1, %s17
      %p19 = scmp.lt.s32.totalorder %s17, 0
      %s20 = scalar_select %p19, %s17, 0
      %s21 = scalar_lea.vmem %s0, %s20
      %s22 = sadd.s32 0, 0
      %p23 = scmp.lt.s32.totalorder %s22, 0
      %s24 = scalar_select %p23, %s22, 0
      %s25 = smul.u32 8, %s24
      %s26 = ssub.s32 1, %s25
    $region5: #{tpu_custom_call.1} parent=1 // pred_fallthru
      _
    // Predicated region
    $region6: #{tpu_custom_call.1} parent=1 // pred_check
      _
    $region7: #{tpu_custom_call.1} parent=1 // pred_check_branch
      %28 = sbr.rel (0) target = $region9
    $region8: #{tpu_custom_call.1} parent=1 // pred_region
      %s29 = sadd.s32 0, 0
      %p30 = scmp.lt.s32.totalorder %s29, 0
      %s31 = scalar_select %p30, %s29, 0
      %s32 = smul.u32 4, %s31
      %s33 = ssub.s32 1, %s32
      %p34 = scmp.lt.s32.totalorder %s32, 0
      %s35 = scalar_select %p34, %s32, 0
      %s36 = scalar_lea.vmem %s1, %s35
      %s37 = sadd.s32 0, 0
      %p38 = scmp.lt.s32.totalorder %s37, 0
      %s39 = scalar_select %p38, %s37, 0
      %s40 = smul.u32 4, %s39
      %s41 = ssub.s32 1, %s40
    $region9: #{tpu_custom_call.1} parent=1 // pred_fallthru
      _
    // Predicated region
    $region10: #{tpu_custom_call.1} parent=1 // pred_check
      _
    $region11: #{tpu_custom_call.1} parent=1 // pred_check_branch
      %43 = sbr.rel (0) target = $region13
    $region12: #{tpu_custom_call.1} parent=1 // pred_region
      _
    $region13: #{tpu_custom_call.1} parent=1 // pred_fallthru
      _
    // Predicated region
    $region14: #{tpu_custom_call.1} parent=1 // pred_check
      _
    $region15: #{tpu_custom_call.1} parent=1 // pred_check_branch
      %45 = sbr.rel (0) target = $region17
    $region16: #{tpu_custom_call.1} parent=1 // pred_region
      _
    $region17: #{tpu_custom_call.1} parent=1 // pred_fallthru
      _
    // Predicated region
    $region18: #{tpu_custom_call.1} parent=1 // pred_check
      _
    $region19: #{tpu_custom_call.1} parent=1 // pred_check_branch
      %47 = sbr.rel (0) target = $region21
    $region20: #{tpu_custom_call.1} parent=1 // pred_region
      _
    $region21: #{tpu_custom_call.1} parent=1 // pred_fallthru
      _
    // Predicated region
    $region22: #{tpu_custom_call.1} parent=1 // pred_check
      _
    $region23: #{tpu_custom_call.1} parent=1 // pred_check_branch
      %49 = sbr.rel (0) target = $region25
    $region24: #{tpu_custom_call.1} parent=1 // pred_region
      _
    $region25: #{tpu_custom_call.1} parent=1 // pred_fallthru
      _
    %s50 = sadd.s32 0, 0
    %p51 = scmp.lt.s32.totalorder %s50, 0
    %s52 = scalar_select %p51, %s50, 0
    %s53 = smul.u32 8, %s52
    %s54 = ssub.s32 1, %s53
    %p55 = scmp.lt.s32.totalorder %s53, 0
    %s56 = scalar_select %p55, %s53, 0
    %s57 = scalar_lea.vmem %s0, %s56
    %s58 = sadd.s32 0, 0
    %p59 = scmp.lt.s32.totalorder %s58, 0
    %s60 = scalar_select %p59, %s58, 0
    %s61 = smul.u32 4, %s60
    %s62 = ssub.s32 1, %s61
    %p63 = scmp.lt.s32.totalorder %s61, 0
    %s64 = scalar_select %p63, %s61, 0
    %s65 = scalar_lea.vmem %s1, %s64
    %s66 = sadd.s32 0, 0
    %p67 = scmp.lt.s32.totalorder %s66, 0
    %s68 = scalar_select %p67, %s66, 0
    %s69 = smul.u32 8, %s68
    %s70 = ssub.s32 1, %s69
    %p71 = scmp.lt.s32.totalorder %s69, 0
    %s72 = scalar_select %p71, %s69, 0
    %s73 = scalar_lea.vmem %s0, %s72
    %s74 = sadd.s32 0, 0
    %p75 = scmp.lt.s32.totalorder %s74, 0
    %s76 = scalar_select %p75, %s74, 0
    %s77 = smul.u32 8, %s76
    %s78 = ssub.s32 1, %s77
    %s79 = sadd.s32 0, 0
    %p80 = scmp.lt.s32.totalorder %s79, 0
    %s81 = scalar_select %p80, %s79, 0
    %s82 = smul.u32 4, %s81
    %s83 = ssub.s32 1, %s82
    %p84 = scmp.lt.s32.totalorder %s82, 0
    %s85 = scalar_select %p84, %s82, 0
    %s86 = scalar_lea.vmem %s1, %s85
    %s87 = sadd.s32 0, 0
    %p88 = scmp.lt.s32.totalorder %s87, 0
    %s89 = scalar_select %p88, %s87, 0
    %s90 = smul.u32 4, %s89
    %s91 = ssub.s32 1, %s90
    %p93 = scmp.eq.s32.totalorder 0, 0
    // Predicated region
    $region26: #{tpu_custom_call.1} parent=1 // pred_check
      %p94 = pneg %p93
    $region27: #{tpu_custom_call.1} parent=1 // pred_check_branch
      %96 = sbr.rel (%p94) target = $region29
    $region28: #{tpu_custom_call.1} parent=1 // pred_region
      %vm97 = vcmask 253952
      %98 = vst.msk [vmem:[#allocation2] sm:$0x1] %vm97, 0.0
    $region29: #{tpu_custom_call.1} parent=1 // pred_fallthru
      _
    %v99 = vld [vmem:[%s73] sm:$0xff]
    %v100 = vld [vmem:[%s86] sm:$0x1]
    %v101 = vld [vmem:[%s86 + $0x1] sm:$0x1]
    %v102 = vld [vmem:[%s86 + $0x2] sm:$0x1]
    %v103 = vld [vmem:[%s86 + $0x3] sm:$0x1]
    %v104 = vld [vmem:[%s2] sm:$0xf]
    %v105 = vld [vmem:[%s2 + $0x4] sm:$0xf]
    %v106 = vld [vmem:[%s2 + $0x8] sm:$0xf]
    %v107 = vld [vmem:[%s2 + $0xc] sm:$0xf]
    %v108 = vld [vmem:[%s3] sm:$0xf]
    %v109 = vld [vmem:[%s3 + $0x4] sm:$0xf]
    %v110 = vld [vmem:[%s3 + $0x8] sm:$0xf]
    %v111 = vld [vmem:[%s3 + $0xc] sm:$0xf]
    %v112 = vld [vmem:[%s3 + $0x10] sm:$0xf]
    %v113 = vld [vmem:[%s3 + $0x14] sm:$0xf]
    %v114 = vld [vmem:[%s3 + $0x18] sm:$0xf]
    %v115 = vld [vmem:[%s3 + $0x1c] sm:$0xf]
    %v116 = vld [vmem:[%s3 + $0x20] sm:$0xf]
    %v117 = vld [vmem:[%s3 + $0x24] sm:$0xf]
    %v118 = vld [vmem:[%s3 + $0x28] sm:$0xf]
    %v119 = vld [vmem:[%s3 + $0x2c] sm:$0xf]
    %v120 = vld [vmem:[%s3 + $0x30] sm:$0xf]
    %v121 = vld [vmem:[%s3 + $0x34] sm:$0xf]
    %v122 = vld [vmem:[%s3 + $0x38] sm:$0xf]
    %v123 = vld [vmem:[%s3 + $0x3c] sm:$0xf]
    %v124 = vld [vmem:[%s4] sm:$0xf]
    %v125 = vld [vmem:[%s4 + $0x4] sm:$0xf]
    %v126 = vld [vmem:[%s4 + $0x8] sm:$0xf]
    %v127 = vld [vmem:[%s4 + $0xc] sm:$0xf]
    %v128 = vld [vmem:[%s4 + $0x10] sm:$0xf]
    %v129 = vld [vmem:[%s4 + $0x14] sm:$0xf]
    %v130 = vld [vmem:[%s4 + $0x18] sm:$0xf]
    %v131 = vld [vmem:[%s4 + $0x1c] sm:$0xf]
    %v132 = vld [vmem:[%s4 + $0x20] sm:$0xf]
    %v133 = vld [vmem:[%s4 + $0x24] sm:$0xf]
    %v134 = vld [vmem:[%s4 + $0x28] sm:$0xf]
    %v135 = vld [vmem:[%s4 + $0x2c] sm:$0xf]
    %v136 = vld [vmem:[%s4 + $0x30] sm:$0xf]
    %v137 = vld [vmem:[%s4 + $0x34] sm:$0xf]
    %v138 = vld [vmem:[%s4 + $0x38] sm:$0xf]
    %v139 = vld [vmem:[%s4 + $0x3c] sm:$0xf]
    %v140 = vld [vmem:[%s5] sm:$0x1]
    %142 = vst [vmem:[#allocation1] ss:$9 sm:$0xff] %v100
    %s144 = scalar_lea.vmem [#allocation1], 1
    %145 = vst [vmem:[%s144] ss:$9 sm:$0xff] %v101
    %s147 = scalar_lea.vmem [#allocation1], 2
    %148 = vst [vmem:[%s147] ss:$9 sm:$0xff] %v102
    %s150 = scalar_lea.vmem [#allocation1], 3
    %151 = vst [vmem:[%s150] ss:$9 sm:$0xff] %v103
    %v152 = vld [vmem:[#allocation1] sm:$0xff]
    %v157 = vunpack.c.l.b16 %v104
    %v158 = vunpack.c.l.b16 %v105
    %v159 = vunpack.c.l.b16 %v106
    %v160 = vunpack.c.l.b16 %v107
    %v161 = vpack.c.b16 %v158, %v157
    %v162 = vpack.c.b16 %v160, %v159
    %vm165 = vcmask 261120
    %v166 = vsel %vm165, %v152, 0
    %168 = vmatpush.bf16.msra.mxu0 0
    %169 = vmatpush.bf16.msra.mxu0 0
    %170 = vmatpush.bf16.msra.mxu0 0
    %171 = vmatpush.bf16.msra.mxu0 0
    %172 = vmatpush.bf16.msra.mxu0 0
    %173 = vmatpush.bf16.msra.mxu0 0
    %174 = vmatpush.bf16.msra.mxu0 %v162
    %175 = vmatpush.bf16.msra.mxu0 %v161
    %176 = vmatmul.bf16.gmra.mxu0 %v166
    %v177 = vpop.f32.mrf.mxu0
    %v178 = vadd.f32 0.0, %v177
    %v179 = vpop.f32.mrf.mxu0
    %180 = vdwg.mxu0
    %v182 = vperm.slane %v140, 0
    %v184 = vsub.f32 %v178, %v182
    %v185 = vand.u32 2147483647, %v184
    %vm186 = vcmp.lt.f32.partialorder %v185, 0.5
    %v187 = vsel %vm186, 1, 0
    %v188 = vcvt.s32.f32 %v187
    %v189 = vmul.f32 %v99, %v188
    %v190 = vpack.c.bf16 %v189, %v189
    %v207 = vunpack.c.l.b16 %v108
    %v208 = vunpack.c.l.b16 %v109
    %v209 = vunpack.c.l.b16 %v110
    %v210 = vunpack.c.l.b16 %v111
    %v211 = vunpack.c.l.b16 %v112
    %v212 = vunpack.c.l.b16 %v113
    %v213 = vunpack.c.l.b16 %v114
    %v214 = vunpack.c.l.b16 %v115
    %v215 = vunpack.c.l.b16 %v116
    %v216 = vunpack.c.l.b16 %v117
    %v217 = vunpack.c.l.b16 %v118
    %v218 = vunpack.c.l.b16 %v119
    %v219 = vunpack.c.l.b16 %v120
    %v220 = vunpack.c.l.b16 %v121
    %v221 = vunpack.c.l.b16 %v122
    %v222 = vunpack.c.l.b16 %v123
    %v223 = vpack.c.b16 %v208, %v207
    %v224 = vpack.c.b16 %v210, %v209
    %v225 = vpack.c.b16 %v212, %v211
    %v226 = vpack.c.b16 %v214, %v213
    %v227 = vpack.c.b16 %v216, %v215
    %v228 = vpack.c.b16 %v218, %v217
    %v229 = vpack.c.b16 %v220, %v219
    %v230 = vpack.c.b16 %v222, %v221
    %239 = vmatpush.bf16.msra.mxu0 %v230
    %240 = vmatpush.bf16.msra.mxu0 %v229
    %241 = vmatpush.bf16.msra.mxu0 %v228
    %242 = vmatpush.bf16.msra.mxu0 %v227
    %243 = vmatpush.bf16.msra.mxu0 %v226
    %244 = vmatpush.bf16.msra.mxu0 %v225
    %245 = vmatpush.bf16.msra.mxu0 %v224
    %246 = vmatpush.bf16.msra.mxu0 %v223
    %247 = vmatmul.bf16.gmra.mxu0 %v190
    %v248 = vpop.f32.mrf.mxu0
    %v249 = vadd.f32 0.0, %v248
    %v250 = vpop.f32.mrf.mxu0
    %251 = vdwg.mxu0
    %v252 = vsub.f32 %v99, %v249
    %v253 = vmul.f32 %v252, 1.442695
    %v254 = vpow.pop %v253
    %v255 = vpack.c.bf16 %v254, %v254
    %v272 = vunpack.c.l.b16 %v124
    %v273 = vunpack.c.l.b16 %v125
    %v274 = vunpack.c.l.b16 %v126
    %v275 = vunpack.c.l.b16 %v127
    %v276 = vunpack.c.l.b16 %v128
    %v277 = vunpack.c.l.b16 %v129
    %v278 = vunpack.c.l.b16 %v130
    %v279 = vunpack.c.l.b16 %v131
    %v280 = vunpack.c.l.b16 %v132
    %v281 = vunpack.c.l.b16 %v133
    %v282 = vunpack.c.l.b16 %v134
    %v283 = vunpack.c.l.b16 %v135
    %v284 = vunpack.c.l.b16 %v136
    %v285 = vunpack.c.l.b16 %v137
    %v286 = vunpack.c.l.b16 %v138
    %v287 = vunpack.c.l.b16 %v139
    %v288 = vpack.c.b16 %v273, %v272
    %v289 = vpack.c.b16 %v275, %v274
    %v290 = vpack.c.b16 %v277, %v276
    %v291 = vpack.c.b16 %v279, %v278
    %v292 = vpack.c.b16 %v281, %v280
    %v293 = vpack.c.b16 %v283, %v282
    %v294 = vpack.c.b16 %v285, %v284
    %v295 = vpack.c.b16 %v287, %v286
    %304 = vmatpush.bf16.msra.mxu0 %v295
    %305 = vmatpush.bf16.msra.mxu0 %v294
    %306 = vmatpush.bf16.msra.mxu0 %v293
    %307 = vmatpush.bf16.msra.mxu0 %v292
    %308 = vmatpush.bf16.msra.mxu0 %v291
    %309 = vmatpush.bf16.msra.mxu0 %v290
    %310 = vmatpush.bf16.msra.mxu0 %v289
    %311 = vmatpush.bf16.msra.mxu0 %v288
    %312 = vmatmul.bf16.gmra.mxu0 %v255
    %v313 = vpop.f32.mrf.mxu0
    %v314 = vadd.f32 0.0, %v313
    %v315 = vpop.f32.mrf.mxu0
    %316 = vdwg.mxu0
    %v317 = vmul.f32 %v252, %v188
    %v318 = vpack.c.bf16 %v317, %v317
    %319 = vmatpush.bf16.msra.mxu0 %v295
    %320 = vmatpush.bf16.msra.mxu0 %v294
    %321 = vmatpush.bf16.msra.mxu0 %v293
    %322 = vmatpush.bf16.msra.mxu0 %v292
    %323 = vmatpush.bf16.msra.mxu0 %v291
    %324 = vmatpush.bf16.msra.mxu0 %v290
    %325 = vmatpush.bf16.msra.mxu0 %v289
    %326 = vmatpush.bf16.msra.mxu0 %v288
    %327 = vmatmul.bf16.gmra.mxu0 %v318
    %v328 = vpop.f32.mrf.mxu0
    %v329 = vadd.f32 0.0, %v328
    %v330 = vpop.f32.mrf.mxu0
    %331 = vdwg.mxu0
    %v332 = vmul.f32 %v329, 1.442695
    %v333 = vpow.pop %v332
    %v334 = vrcp.pop %v314
    %v335 = vmul.f32 %v333, %v334
    %v336 = vsub.f32 1.0, %v335
    %v337 = vmax.f32 %v336, 0.0
    %v338 = vmul.f32 %v337, %v337
    %v339 = vadd.f32 %v335, 1e-08
    %v340 = vlog2.pop %v339
    %v341 = vmul.f32 %v340, 0.6931472
    %v342 = vsub.f32 0.0, %v341
    %v343 = vmul.f32 %v338, %v342
    %s344 = sadd.s32 0, 0
    %s345 = smul.u32 %s344, 256
    %s346 = sadd.s32 %s345, 256
    %p347 = scmp.gt.s32.totalorder %s346, 8
    // Predicated region
    $region30: #{tpu_custom_call.1} parent=1 // pred_check
      %p348 = pneg %p347
    $region31: #{tpu_custom_call.1} parent=1 // pred_check_branch
      %350 = sbr.rel (%p348) target = $region33
    $region32: #{tpu_custom_call.1} parent=1 // pred_region
      %v351 = vlaneseq
      %v352 = vshrl.u32 %v351, 7
      %v353 = vlaneseq
      %v354 = vand.u32 %v353, 127
      %v355 = vmul.u32 %v352, 32
      %v356 = vstv %s345
      %v357 = vadd.s32 %v356, %v355
      %v358 = vadd.s32 %v357, %v354
      %vm359 = vcmp.lt.s32.totalorder %v358, 8
      %v360 = vsel %vm359, %v343, 0.0
      %v361 = vld [vmem:[#allocation2] sm:$0x1]
      %v362 = vsel %vm165, %v360, 0.0
      %v363 = vrot.slane %v362, 4
      %v364 = vadd.f32 %v362, %v363
      %v365 = vrot.slane %v364, 2
      %v366 = vadd.f32 %v364, %v365
      %v367 = vrot.slane %v366, 1
      %v368 = vadd.f32 %v366, %v367
      %v369 = vadd.f32 %v361, %v368
      %vm370 = vcmask 253952
      %371 = vst.msk [vmem:[#allocation2] sm:$0x1] %vm370, %v369
    $region33: #{tpu_custom_call.1} parent=1 // pred_fallthru
      _
    %p372 = scmp.le.s32.totalorder %s346, 8
    // Predicated region
    $region34: #{tpu_custom_call.1} parent=1 // pred_check
      %p373 = pneg %p372
    $region35: #{tpu_custom_call.1} parent=1 // pred_check_branch
      %375 = sbr.rel (%p373) target = $region37
    $region36: #{tpu_custom_call.1} parent=1 // pred_region
      %v376 = vld [vmem:[#allocation2] sm:$0x1]
      %v377 = vsel %vm165, %v343, 0.0
      %v378 = vrot.slane %v377, 4
      %v379 = vadd.f32 %v377, %v378
      %v380 = vrot.slane %v379, 2
      %v381 = vadd.f32 %v379, %v380
      %v382 = vrot.slane %v381, 1
      %v383 = vadd.f32 %v381, %v382
      %v384 = vadd.f32 %v376, %v383
      %vm385 = vcmask 253952
      %386 = vst.msk [vmem:[#allocation2] sm:$0x1] %vm385, %v384
    $region37: #{tpu_custom_call.1} parent=1 // pred_fallthru
      _
    // Predicated region
    $region38: #{tpu_custom_call.1} parent=1 // pred_check
      %p387 = pneg %p93
    $region39: #{tpu_custom_call.1} parent=1 // pred_check_branch
      %389 = sbr.rel (%p387) target = $region41
    $region40: #{tpu_custom_call.1} parent=1 // pred_region
      %v390 = vld [vmem:[#allocation2] sm:$0x1]
      %vm391 = vcmask 253952
      %392 = vst.msk [vmem:[#allocation3] sm:$0x1] %vm391, %v390
    $region41: #{tpu_custom_call.1} parent=1 // pred_fallthru
      _
    // Predicated region
    $region42: #{tpu_custom_call.1} parent=1 // pred_check
      _
    $region43: #{tpu_custom_call.1} parent=1 // pred_check_branch
      %394 = sbr.rel (0) target = $region45
    $region44: #{tpu_custom_call.1} parent=1 // pred_region
      %396 = vsyncadd [#allocation4], 0
      %s398 = sshll.u32 [#allocation3], 4
      %s399 = int_to_ptr.vmem [resolvable:$true] %s398
      %s400 = sshll.u32 %s6, 4
      %s401 = int_to_ptr.hbm [resolvable:$true] %s400
      %403 = dma.vmem_to_hbm [thread:$0]  %s399, 16, %s401, [#allocation4]
    $region45: #{tpu_custom_call.1} parent=1 // pred_fallthru
      _
    // Predicated region
    $region46: #{tpu_custom_call.1} parent=1 // pred_check
      _
    $region47: #{tpu_custom_call.1} parent=1 // pred_check_branch
      %405 = sbr.rel (0) target = $region49
    $region48: #{tpu_custom_call.1} parent=1 // pred_region
      %407 = dma.done [#allocation4], 16
    $region49: #{tpu_custom_call.1} parent=1 // pred_fallthru
      _
    %408 = vsyncpa [#allocation4], 1

</llo_original>
